<compile_context>
chip_gen: v5e
topology: v5e:2x2
jax: 0.10.0
libtpu: 0.0.40
codegen_flags: <defaults>
</compile_context>

<pallas_src>
import jax
import jax.numpy as jnp
from jax.experimental import pallas as pl
from jax.experimental.pallas import tpu as pltpu


def _center_loss_kernel(x_ref, c_ref, dist_ref):
    """One batch tile: per-row clipped squared distance to the assigned center.

    x_ref, c_ref : (tb, D) tiles (features and pre-gathered center rows).
    dist_ref     : (tb, 1) f32 output tile.
    """
    x = x_ref[...].astype(jnp.float32)                # keep math/accum in f32
    c = c_ref[...].astype(jnp.float32)                # (v5e has no bf16 VPU)
    diff = x - c                                      # VPU elementwise
    d = jnp.sum(diff * diff, axis=1, keepdims=True)   # (tb, 1) lane reduce
    dist_ref[...] = jnp.clip(d, 1e-12, 1.0e12)        # clamp as in PyTorch


def center_loss(x, centers, labels, *, tb=512):
    """x: (B, D) features, centers: (C, D), labels: (B,) int -> scalar f32 loss.

    Matches the PyTorch CenterLoss forward exactly, including its
    clamp-after-mask behavior (each masked-out entry contributes 1e-12).
    """
    b, d = x.shape
    c, _ = centers.shape

    # Bulk row gather on the XLA side (reviewer Option A): one streaming HBM
    # gather instead of tb latency-bound (1, D) micro-DMAs inside the kernel.
    labels = jnp.clip(labels.astype(jnp.int32), 0, c - 1)
    gathered = jnp.take(centers, labels, axis=0, mode="clip")      # (B, D)

    itemsz = x.dtype.itemsize + centers.dtype.itemsize

    # Batch tile: multiple of 16 (bf16 sublane packing; 8 is only the f32
    # minimum), no larger than the 16-padded batch, and small enough that the
    # double-buffered input tiles stay within a conservative VMEM budget.
    tb = max(16, (int(tb) // 16) * 16)
    tb = min(tb, ((b + 15) // 16) * 16)
    while tb > 16 and 2 * tb * d * itemsz > (24 << 20):
        tb //= 2
    tb = max(16, (tb // 16) * 16)

    b_pad = ((b + tb - 1) // tb) * tb
    if b_pad != b:
        x = jnp.pad(x, ((0, b_pad - b), (0, 0)))
        gathered = jnp.pad(gathered, ((0, b_pad - b), (0, 0)))
    num_tiles = b_pad // tb

    cost = pl.CostEstimate(
        flops=3 * b_pad * d,                                   # sub, mul, add
        transcendentals=0,
        bytes_accessed=b_pad * d * itemsz + b_pad * 4,
    )
    # Double-buffered x + gathered tiles, output tile, plus headroom; capped
    # below v7x's 64 MiB physical VMEM, raised above v5e's 16 MiB default.
    vmem_limit = int(
        min(64 << 20, max(4 * tb * d * itemsz + 8 * tb + (4 << 20), 16 << 20))
    )

    dist = pl.pallas_call(
        _center_loss_kernel,
        out_shape=jax.ShapeDtypeStruct((b_pad, 1), jnp.float32),
        grid=(num_tiles,),
        in_specs=[
            pl.BlockSpec((tb, d), lambda i: (i, 0)),   # x tile (auto-pipelined)
            pl.BlockSpec((tb, d), lambda i: (i, 0)),   # gathered-center tile
        ],
        out_specs=pl.BlockSpec((tb, 1), lambda i: (i, 0)),
        compiler_params=pltpu.CompilerParams(
            dimension_semantics=("parallel",),   # independent batch tiles
            vmem_limit_bytes=vmem_limit,
        ),
        cost_estimate=cost,
    )(x, gathered)

    # PyTorch clamps *after* masking: each of the B*(C-1) zeroed entries of
    # the (B, C) dist matrix contributes exactly 1e-12 to the total sum.
    masked_const = jnp.float32(b * (c - 1)) * jnp.float32(1e-12)
    return (jnp.sum(dist[:b, 0]) + masked_const) / jnp.float32(b)


def center_loss_ref(x, centers, labels):
    """Plain-JAX reference mirroring the PyTorch forward exactly."""
    b, _ = x.shape
    c, _ = centers.shape
    distmat = (
        jnp.sum(x ** 2, axis=1, keepdims=True)
        + jnp.sum(centers ** 2, axis=1)[None, :]
        - 2.0 * x @ centers.T
    )
    mask = (labels[:, None] == jnp.arange(c)[None, :]).astype(jnp.float32)
    dist = jnp.clip(distmat * mask, 1e-12, 1.0e12)
    return jnp.sum(dist) / b


if __name__ == "__main__":
    num_classes = 10
    feat_dim = 32
    batch = 8

    key = jax.random.PRNGKey(0)
    k_x, k_c, k_l = jax.random.split(key, 3)

    # Deterministic parameter init (module __init__: centers ~ randn(C, D)).
    centers = jax.random.normal(k_c, (num_classes, feat_dim), dtype=jnp.float32)

    x = jax.random.normal(k_x, (batch, feat_dim), dtype=jnp.float32)
    labels = jax.random.randint(k_l, (batch,), 0, num_classes, dtype=jnp.int32)

    loss_fn = jax.jit(center_loss)
    loss = jax.block_until_ready(loss_fn(x, centers, labels))
    ref = center_loss_ref(x, centers, labels)

    # Kernel computes (x - c)^2 directly (numerically cleaner than the
    # ||x||^2 + ||c||^2 - 2<x,c> expansion), so compare with a tolerance.
    assert jnp.allclose(loss, ref, rtol=1e-4, atol=1e-6), (loss, ref)
    print("KERNEL_OK")
</pallas_src>

<mosaic_0001>
module attributes {stable_mosaic.version = 11 : i64} {
  func.func @_center_loss_kernel(%arg0: i32, %arg1: memref<16x32xf32, #tpu.memory_space<vmem>>, %arg2: memref<16x32xf32, #tpu.memory_space<vmem>>, %arg3: memref<16x1xf32, #tpu.memory_space<vmem>>) attributes {dimension_semantics = [#tpu.dimension_semantics<parallel>], iteration_bounds = array<i64: 1>, scalar_prefetch = 0 : i64, scratch_operands = 0 : i64, tpu.core_type = #tpu.core_type<tc>, window_params = [{transform_indices = @transform_0, window_bounds = array<i64: 16, 32>}, {transform_indices = @transform_1, window_bounds = array<i64: 16, 32>}, {transform_indices = @transform_2, window_bounds = array<i64: 16, 1>}]} {
    %c0 = arith.constant 0 : index
    %c0_0 = arith.constant 0 : index
    %0 = vector.load %arg1[%c0, %c0_0] : memref<16x32xf32, #tpu.memory_space<vmem>>, vector<16x32xf32>
    %c0_1 = arith.constant 0 : index
    %c0_2 = arith.constant 0 : index
    %1 = vector.load %arg2[%c0_1, %c0_2] : memref<16x32xf32, #tpu.memory_space<vmem>>, vector<16x32xf32>
    %2 = arith.subf %0, %1 : vector<16x32xf32>
    %3 = arith.mulf %2, %2 : vector<16x32xf32>
    %cst = arith.constant dense<0.000000e+00> : vector<16xf32>
    %4 = vector.multi_reduction <add>, %3, %cst [1] : vector<16x32xf32> to vector<16xf32>
    %5 = vector.shape_cast %4 : vector<16xf32> to vector<16x1xf32>
    %cst_3 = arith.constant 9.99999996E-13 : f32
    %cst_4 = arith.constant 9.99999995E+11 : f32
    %6 = vector.broadcast %cst_3 : f32 to vector<16x1xf32>
    %7 = arith.maximumf %6, %5 : vector<16x1xf32>
    %8 = vector.broadcast %cst_4 : f32 to vector<16x1xf32>
    %9 = arith.minimumf %8, %7 : vector<16x1xf32>
    %c0_5 = arith.constant 0 : index
    %c0_6 = arith.constant 0 : index
    %10 = vector.load %arg3[%c0_5, %c0_6] : memref<16x1xf32, #tpu.memory_space<vmem>>, vector<16x1xf32>
    tpu.vector_store %arg3[%c0_5, %c0_6], %9 {strides = array<i32>} : memref<16x1xf32, #tpu.memory_space<vmem>>, vector<16x1xf32>,
    return
  }
  func.func @transform_0(%arg0: i32) -> (i32, i32) {
    %c0_i32 = arith.constant 0 : i32
    %c0_i32_0 = arith.constant 0 : i32
    return %arg0, %c0_i32 : i32, i32
  }
  func.func @transform_1(%arg0: i32) -> (i32, i32) {
    %c0_i32 = arith.constant 0 : i32
    %c0_i32_0 = arith.constant 0 : i32
    return %arg0, %c0_i32 : i32, i32
  }
  func.func @transform_2(%arg0: i32) -> (i32, i32) {
    %c0_i32 = arith.constant 0 : i32
    %c0_i32_0 = arith.constant 0 : i32
    return %arg0, %c0_i32 : i32, i32
  }
}

</mosaic_0001>

<llo_original>
// kernel: center_loss.1
$region0: #{center_loss.1}
  #allocation0 [shape = 'u32[]', space=smem, size = 0x4, offset = 0x4, fixed_abs, tag = 'smem constant byte address 0x4 - core index']
  #allocation1 [shape = 'u32[72,128]{1,0:T(1,128)}', space=vmem, size = 0x9000, scoped, tag = 'internal scratch']
  %s0 = inlined_call_operand.vmem [shape: f32[16,32], index: 0, kind: input, shape index: {}]
  %s1 = inlined_call_operand.vmem [shape: f32[16,32], index: 1, kind: input, shape index: {}]
  %s2 = inlined_call_operand.vmem [shape: f32[16,1], index: 2, kind: output, shape index: {}]
  %s3 = sld [smem:[#allocation0]]
  $region18: #{center_loss.1} parent=0
    _
  %s5 = ssub.s32 1, %s3
  %s6 = scalar_select 0, %s5, %s3
  // Predicated region
  $region2: #{center_loss.1} parent=0 // pred_check
    _
  $region3: #{center_loss.1} parent=0 // pred_check_branch
    %8 = sbr.rel (0) target = $region5
  $region4: #{center_loss.1} parent=0 // pred_region
    _
  $region5: #{center_loss.1} parent=0 // pred_fallthru
    _
  // Predicated region
  $region6: #{center_loss.1} parent=0 // pred_check
    _
  $region7: #{center_loss.1} parent=0 // pred_check_branch
    %10 = sbr.rel (0) target = $region9
  $region8: #{center_loss.1} parent=0 // pred_region
    _
  $region9: #{center_loss.1} parent=0 // pred_fallthru
    _
  %v11 = vld [vmem:[%s0] sm:$0xff]
  %v12 = vld [vmem:[%s0 + $0x8] sm:$0xff]
  %v13 = vld [vmem:[%s1] sm:$0xff]
  %v14 = vld [vmem:[%s1 + $0x8] sm:$0xff]
  %v15 = vsub.f32 %v11, %v13
  %v16 = vsub.f32 %v12, %v14
  %v17 = vmul.f32 %v15, %v15
  %v18 = vmul.f32 %v16, %v16
  %vm19 = vcmask 261120
  %v20 = vsel %vm19, %v17, 0.0
  %21 = vadd.xlane.f32.xlu0 %v20
  %v22 = vpop.xlane.xlu0 %21
  %v23 = vsel %vm19, %v18, 0.0
  %24 = vadd.xlane.f32.xlu0 %v23
  %v25 = vpop.xlane.xlu0 %24
  %v26 = vmax.f32 %v22, 1e-12
  %v27 = vmax.f32 %v25, 1e-12
  %v28 = vmin.f32 %v26, 1e+12
  %v29 = vmin.f32 %v27, 1e+12
  %vm30 = vcmask 7168
  %31 = vst.msk [vmem:[%s2] sm:$0xff] %vm30, %v28
  %32 = vst.msk [vmem:[%s2 + $0x8] sm:$0xff] %vm30, %v29
  // Predicated region
  $region10: #{center_loss.1} parent=0 // pred_check
    _
  $region11: #{center_loss.1} parent=0 // pred_check_branch
    %34 = sbr.rel (0) target = $region13
  $region12: #{center_loss.1} parent=0 // pred_region
    _
  $region13: #{center_loss.1} parent=0 // pred_fallthru
    _
  // Predicated region
  $region14: #{center_loss.1} parent=0 // pred_check
    _
  $region15: #{center_loss.1} parent=0 // pred_check_branch
    %36 = sbr.rel (0) target = $region17
  $region16: #{center_loss.1} parent=0 // pred_region
    _
  $region17: #{center_loss.1} parent=0 // pred_fallthru
    _

</llo_original>
